<compile_context>
chip_gen: v6e
topology: v6e:2x2x1
jax: 0.10.0
libtpu: 0.0.40
codegen_flags: <defaults>
</compile_context>

<pallas_src>
import functools

import jax
import jax.numpy as jnp
from jax.experimental import pallas as pl
from jax.experimental.pallas import tpu as pltpu


def _se_block_kernel(x_ref, w1t_ref, w2t_ref, o_ref, *, inv_hw):
    """One batch-block of the SE forward.

    x_ref:   (Bt, C, HW)  native dtype, HW is the true (unpadded) spatial size
    w1t_ref: (C, C_red)   fc1 weight, pre-transposed, native dtype
    w2t_ref: (C_red, C)   fc2 weight, pre-transposed, native dtype
    o_ref:   (Bt, C, HW)
    """
    # ---- Squeeze: global average pool over the lane (HW) axis -------------
    # f32 accumulation; for f32 inputs the astype is a no-op at trace time.
    pooled = jnp.sum(x_ref[...].astype(jnp.float32), axis=-1) * inv_hw  # (Bt, C)

    # ---- Excitation: fc1 -> relu -> fc2 -> sigmoid (tiny, on the MXU) -----
    # Weights stay in their native dtype (no per-step up-cast); only the tiny
    # (Bt, C) activations are cast to match, with f32 accumulation.
    hidden = jnp.maximum(
        jnp.dot(pooled.astype(w1t_ref.dtype), w1t_ref[...],
                preferred_element_type=jnp.float32), 0.0)               # (Bt, Cr)
    gate = jax.nn.sigmoid(
        jnp.dot(hidden.astype(w2t_ref.dtype), w2t_ref[...],
                preferred_element_type=jnp.float32))                    # (Bt, C)

    # ---- Scale --------------------------------------------------------------
    # Re-read x from VMEM (tells regalloc it is a re-read; the tile can never
    # live in vregs anyway) and multiply in the input's native dtype — only
    # the tiny gate is cast, no full-tile cast passes.
    o_ref[...] = x_ref[...] * gate.astype(o_ref.dtype)[:, :, None]


def se_block(x, w1, w2):
    """SEBlock forward.  x: (B, C, H, W) NCHW; w1: (C//r, C); w2: (C, C//r)."""
    b, c, h, w = x.shape
    hw = h * w
    c_red = w1.shape[0]
    itemsize = jnp.dtype(x.dtype).itemsize

    # No padding / slicing: reshapes below are metadata-only, and the kernel
    # block's last two dims equal the full array dims (legal for any HW).
    x_flat = x.reshape(b, c, hw)

    # Pre-transpose weights once so the kernel matmuls need no transposes.
    w1_t = jnp.transpose(w1)                                   # (C, C_red)
    w2_t = jnp.transpose(w2)                                   # (C_red, C)

    # ---- Batch block size ---------------------------------------------------
    # Prefer grid steps over huge tiles: a ~2-4 MiB tile already reaches ~85%
    # of the HBM roofline, and >=4 steps (even count when possible) keeps the
    # BlockSpec pipeline overlapped and lets v7x shard the "parallel" axis
    # across both TensorCores.
    tile_bytes = c * hw * itemsize
    budget = 4 * 1024 * 1024
    cap_budget = max(1, budget // max(tile_bytes, 1))
    target_steps = min(4, b)
    cap_steps = max(1, b // target_steps)
    cap = max(1, min(b, cap_budget, cap_steps))
    divisors = [d for d in range(1, cap + 1) if b % d == 0]
    even_divs = [d for d in divisors if (b // d) % 2 == 0]
    block_b = max(even_divs) if even_divs else max(divisors)
    grid_steps = b // block_b
    # TODO(synk): for very large feature maps (C * HW * itemsize beyond the
    # VMEM headroom even at block_b=1) add a two-pass HW-tiled path
    # (pool/accumulate pass + gate/scale pass).

    # ---- Generation-aware VMEM budget --------------------------------------
    vmem_cap = 64 << 20                     # conservative fallback (v7x-sized)
    try:
        vmem_cap = int(pltpu.get_tpu_info().vmem_capacity_bytes)
    except Exception:
        pass
    # Never ask for more than ~75% of physical VMEM: <=48 MiB on v7x (64 MiB
    # per TensorCore), <=96 MiB on v5e/v6e (128 MiB) — leaves headroom for
    # Mosaic internal scratch and semaphores.
    headroom_cap = min(vmem_cap - (16 << 20), (vmem_cap * 3) // 4)

    # Spare VMEM on v5e/v6e: 3-deep buffering on the big operands keeps the
    # DMA engine busy through each step's serialized pool->FC->scale tail.
    # Keep the default 2-deep pipeline on v7x / short grids.
    deep_pipeline = (vmem_cap >= (96 << 20)) and (grid_steps >= 3)
    n_buffers = 3 if deep_pipeline else 2

    block_bytes = block_b * tile_bytes
    w_bytes = (w1.size + w2.size) * jnp.dtype(w1.dtype).itemsize
    needed = 2 * n_buffers * block_bytes + 2 * w_bytes + (4 << 20)
    vmem_limit = int(min(max(needed, 32 << 20), headroom_cap))

    block_shape = (block_b, c, hw)
    index_map = lambda i: (i, 0, 0)
    if deep_pipeline:
        x_in_spec = pl.BlockSpec(block_shape, index_map,
                                 pipeline_mode=pl.Buffered(3))
        x_out_spec = pl.BlockSpec(block_shape, index_map,
                                  pipeline_mode=pl.Buffered(3))
    else:
        x_in_spec = pl.BlockSpec(block_shape, index_map)
        x_out_spec = pl.BlockSpec(block_shape, index_map)

    # Mem-bound hint: one read + one write of x dominates.
    cost = pl.CostEstimate(
        flops=int(2 * b * c * hw + 4 * b * c * c_red),
        transcendentals=int(b * c),
        bytes_accessed=int(2 * b * c * hw * itemsize + 2 * w_bytes),
    )

    kernel = functools.partial(_se_block_kernel, inv_hw=1.0 / float(hw))

    out = pl.pallas_call(
        kernel,
        out_shape=jax.ShapeDtypeStruct((b, c, hw), x.dtype),
        grid_spec=pltpu.PrefetchScalarGridSpec(
            num_scalar_prefetch=0,
            grid=(grid_steps,),
            in_specs=[
                x_in_spec,
                pl.BlockSpec((c, c_red), lambda i: (0, 0)),
                pl.BlockSpec((c_red, c), lambda i: (0, 0)),
            ],
            out_specs=x_out_spec,
        ),
        compiler_params=pltpu.CompilerParams(
            dimension_semantics=("parallel",),
            vmem_limit_bytes=vmem_limit,
        ),
        cost_estimate=cost,
    )(x_flat, w1_t, w2_t)

    return out.reshape(b, c, h, w)


def se_block_ref(x, w1, w2):
    """Pure-JAX reference mirroring the PyTorch forward."""
    y = jnp.mean(x, axis=(2, 3))                        # (B, C)
    y = jnp.maximum(y @ w1.T, 0.0)                      # (B, C//r)
    y = jax.nn.sigmoid(y @ w2.T)                        # (B, C)
    return x * y[:, :, None, None]


if __name__ == "__main__":
    key = jax.random.PRNGKey(0)
    k_x, k_w1, k_w2 = jax.random.split(key, 3)

    # Small but representative SE shape; H*W = 196 exercises the
    # non-128-multiple spatial-size path (masked edge store, no padding).
    B, C, H, W = 2, 32, 14, 14
    reduction = 16
    C_red = C // reduction

    x = jax.random.normal(k_x, (B, C, H, W), dtype=jnp.float32)
    # Deterministic synthetic weights (shapes match nn.Linear(..., bias=False)).
    w1 = jax.random.normal(k_w1, (C_red, C), dtype=jnp.float32) * 0.1
    w2 = jax.random.normal(k_w2, (C, C_red), dtype=jnp.float32) * 0.1

    out = jax.block_until_ready(se_block(x, w1, w2))

    ref = se_block_ref(x, w1, w2)
    assert out.shape == (B, C, H, W)
    assert jnp.allclose(out, ref, atol=2e-5, rtol=2e-5), "mismatch vs reference"

    print("KERNEL_OK")
</pallas_src>

<mosaic_0001>
module attributes {stable_mosaic.version = 11 : i64} {
  func.func @_se_block_kernel(%arg0: i32, %arg1: memref<1x32x196xf32, #tpu.memory_space<vmem>>, %arg2: memref<32x2xf32, #tpu.memory_space<vmem>>, %arg3: memref<2x32xf32, #tpu.memory_space<vmem>>, %arg4: memref<1x32x196xf32, #tpu.memory_space<vmem>>) attributes {dimension_semantics = [#tpu.dimension_semantics<parallel>], iteration_bounds = array<i64: 2>, scalar_prefetch = 0 : i64, scratch_operands = 0 : i64, tpu.core_type = #tpu.core_type<tc>, window_params = [{transform_indices = @transform_0, window_bounds = array<i64: 1, 32, 196>}, {pipeline_mode = #tpu.pipeline_mode<synchronous>, transform_indices = @transform_1, window_bounds = array<i64: 32, 2>}, {pipeline_mode = #tpu.pipeline_mode<synchronous>, transform_indices = @transform_2, window_bounds = array<i64: 2, 32>}, {transform_indices = @transform_3, window_bounds = array<i64: 1, 32, 196>}]} {
    %c0 = arith.constant 0 : index
    %c0_0 = arith.constant 0 : index
    %c0_1 = arith.constant 0 : index
    %0 = vector.load %arg1[%c0, %c0_0, %c0_1] : memref<1x32x196xf32, #tpu.memory_space<vmem>>, vector<1x32x196xf32>
    %cst = arith.constant dense<0.000000e+00> : vector<1x32xf32>
    %1 = vector.multi_reduction <add>, %0, %cst [2] : vector<1x32x196xf32> to vector<1x32xf32>
    %cst_2 = arith.constant 0.00510204071 : f32
    %2 = vector.broadcast %cst_2 : f32 to vector<1x32xf32>
    %3 = arith.mulf %1, %2 : vector<1x32xf32>
    %c0_3 = arith.constant 0 : index
    %c0_4 = arith.constant 0 : index
    %4 = vector.load %arg2[%c0_3, %c0_4] : memref<32x2xf32, #tpu.memory_space<vmem>>, vector<32x2xf32>
    %cst_5 = arith.constant dense<0.000000e+00> : vector<1x2xf32>
    %5 = tpu.matmul %3, %4, %cst_5 {dimension_numbers = #tpu.dot_dimension_numbers<[1], [0], [0], [1], [0, 0, 1, 1], [], []>} : vector<1x32xf32>, vector<32x2xf32>, vector<1x2xf32> -> vector<1x2xf32>
    %cst_6 = arith.constant 0.000000e+00 : f32
    %6 = vector.broadcast %cst_6 : f32 to vector<1x2xf32>
    %7 = arith.maximumf %5, %6 : vector<1x2xf32>
    %c0_7 = arith.constant 0 : index
    %c0_8 = arith.constant 0 : index
    %8 = vector.load %arg3[%c0_7, %c0_8] : memref<2x32xf32, #tpu.memory_space<vmem>>, vector<2x32xf32>
    %cst_9 = arith.constant dense<0.000000e+00> : vector<1x32xf32>
    %9 = tpu.matmul %7, %8, %cst_9 {dimension_numbers = #tpu.dot_dimension_numbers<[1], [0], [0], [1], [0, 0, 1, 1], [], []>} : vector<1x2xf32>, vector<2x32xf32>, vector<1x32xf32> -> vector<1x32xf32>
    %10 = arith.negf %9 : vector<1x32xf32>
    %11 = math.exp %10 : vector<1x32xf32>
    %cst_10 = arith.constant 1.000000e+00 : f32
    %12 = vector.broadcast %cst_10 : f32 to vector<1x32xf32>
    %13 = arith.addf %12, %11 : vector<1x32xf32>
    %14 = arith.divf %12, %13 : vector<1x32xf32>
    %c0_11 = arith.constant 0 : index
    %c0_12 = arith.constant 0 : index
    %c0_13 = arith.constant 0 : index
    %15 = vector.load %arg1[%c0_11, %c0_12, %c0_13] : memref<1x32x196xf32, #tpu.memory_space<vmem>>, vector<1x32x196xf32>
    %16 = vector.shape_cast %14 : vector<1x32xf32> to vector<1x32x1xf32>
    %17 = vector.broadcast %16 : vector<1x32x1xf32> to vector<1x32x196xf32>
    %18 = arith.mulf %15, %17 : vector<1x32x196xf32>
    %c0_14 = arith.constant 0 : index
    %c0_15 = arith.constant 0 : index
    %c0_16 = arith.constant 0 : index
    %19 = vector.load %arg4[%c0_14, %c0_15, %c0_16] : memref<1x32x196xf32, #tpu.memory_space<vmem>>, vector<1x32x196xf32>
    tpu.vector_store %arg4[%c0_14, %c0_15, %c0_16], %18 {strides = array<i32>} : memref<1x32x196xf32, #tpu.memory_space<vmem>>, vector<1x32x196xf32>,
    return
  }
  func.func @transform_0(%arg0: i32) -> (i32, i32, i32) {
    %c0_i32 = arith.constant 0 : i32
    %c0_i32_0 = arith.constant 0 : i32
    %c0_i32_1 = arith.constant 0 : i32
    return %arg0, %c0_i32, %c0_i32_0 : i32, i32, i32
  }
  func.func @transform_1(%arg0: i32) -> (i32, i32) {
    %c0_i32 = arith.constant 0 : i32
    %c0_i32_0 = arith.constant 0 : i32
    %c0_i32_1 = arith.constant 0 : i32
    return %c0_i32, %c0_i32_0 : i32, i32
  }
  func.func @transform_2(%arg0: i32) -> (i32, i32) {
    %c0_i32 = arith.constant 0 : i32
    %c0_i32_0 = arith.constant 0 : i32
    %c0_i32_1 = arith.constant 0 : i32
    return %c0_i32, %c0_i32_0 : i32, i32
  }
  func.func @transform_3(%arg0: i32) -> (i32, i32, i32) {
    %c0_i32 = arith.constant 0 : i32
    %c0_i32_0 = arith.constant 0 : i32
    %c0_i32_1 = arith.constant 0 : i32
    return %arg0, %c0_i32, %c0_i32_0 : i32, i32, i32
  }
}

</mosaic_0001>

<llo_original>
// kernel: tpu_custom_call.1
$region0: #{tpu_custom_call.1}
  #allocation0 [shape = 'u32[]', space=smem, size = 0x4, offset = 0x4, fixed_abs, tag = 'smem constant byte address 0x4 - core index']
  #allocation1 [shape = 'u32[144,128]{1,0:T(1,128)}', space=vmem, size = 0x12000, scoped, tag = 'internal scratch']
  %s0 = inlined_call_operand.hbm [shape: f32[2,32,196], index: 0, kind: input, shape index: {}]
  %s1 = inlined_call_operand.vmem [shape: f32[32,2], index: 1, kind: input, shape index: {}]
  %s2 = inlined_call_operand.vmem [shape: f32[2,32], index: 2, kind: input, shape index: {}]
  %s3 = inlined_call_operand.hbm [shape: f32[2,32,196], index: 3, kind: output, shape index: {}]
  %s4 = sld [smem:[#allocation0]]
  $region49: #{tpu_custom_call.1} parent=0
    _
  %s6 = ssub.s32 1, %s4
  %s7 = scalar_select 0, %s6, %s4
  $region1: #{tpu_custom_call.1} parent=0
    #allocation2 [shape = 'u8[65536]{0}', space=vmem, size = 0x10000, scoped, tag = 'input window, operand 0']
    #allocation3 [shape = 's32[2]{0}', space=sflag, size = 0x8, scoped, tag = 'scoped memory for tpu_custom_call.1']
    #allocation4 [shape = 's32[2]{0}', space=sflag, size = 0x8, scoped, tag = 'scoped memory for tpu_custom_call.1']
    #allocation5 [shape = 'u8[65536]{0}', space=vmem, size = 0x10000, scoped, tag = 'output window, operand 0']
    %8 = vsyncpa [#allocation3], 0
    %s9 = scalar_lea.sflag [#allocation3], 1
    %10 = vsyncpa %s9, 0
    %11 = vsyncpa [#allocation4], 0
    %s12 = scalar_lea.sflag [#allocation4], 1
    %13 = vsyncpa %s12, 0
    loop: start=0, step=1, limit=4
    $region2: #{tpu_custom_call.1} parent=1 // loop_pre_header
      _
    $region3: #{tpu_custom_call.1} parent=1 // loop_header
      %s15 = sphi 0, %s19
      %p16 = scmp.ge.s32.totalorder %s15, 4
      %s25 = sphi 0, %s27
      %s28 = sphi 0, %s25
      %s29 = sphi 0, %s28
      %s45 = sphi 0, %s29
      %s49 = sphi 0, %s49
      %s51 = sphi 0, %s49
      %s52 = sphi 0, %s51
      %s66 = sphi 0, %s52
      %s70 = sphi 0, %s70
      %s72 = sphi 0, %s70
      %s73 = sphi 0, %s72
      %s87 = sphi 0, %s73
      %s93 = sphi 0, %s95
      %s96 = sphi 0, %s93
      %s97 = sphi 0, %s96
      %s113 = sphi 0, %s97
    $region4: #{tpu_custom_call.1} parent=1 // loop_header_branch
      %18 = sbr.rel (%p16) target = $region8
    $region5: #{tpu_custom_call.1} parent=1 // loop_body
      %s20 = ssub.s32 %s15, 1
      %s21 = ssub.s32 %s15, 2
      %s22 = sadd.s32 %s15, 1
      %s23 = ssub.s32 %s15, %s22
      %p24 = scmp.eq.s32.totalorder %s23, 0
      %s26 = sadd.s32 %s25, 1
      %s27 = scalar_select %p24, %s25, %s26
      %p30 = pneg %p24
      %p31 = scmp.eq.s32.totalorder %s15, 1
      %p32 = por %p30, %p31
      %p33 = scmp.ne.s32.totalorder %s25, %s28
      %p34 = scmp.eq.s32.totalorder %s15, 0
      %p35 = por %p33, %p34
      %p36 = scmp.ne.s32.totalorder %s25, %s28
      %p37 = scmp.eq.s32.totalorder %s20, 1
      %p38 = por %p36, %p37
      %p39 = scmp.ne.s32.totalorder %s28, %s29
      %p40 = scmp.eq.s32.totalorder %s20, 0
      %p41 = por %p39, %p40
      %p42 = scmp.ne.s32.totalorder %s28, %s29
      %p43 = scmp.eq.s32.totalorder %s21, 1
      %p44 = por %p42, %p43
      %p46 = scmp.ne.s32.totalorder %s29, %s45
      %p47 = scmp.eq.s32.totalorder %s21, 0
      %p48 = por %p46, %p47
      %s50 = sadd.s32 %s49, 1
      %p53 = scmp.eq.s32.totalorder %s15, 1
      %p54 = scmp.ne.s32.totalorder %s49, %s51
      %p55 = scmp.eq.s32.totalorder %s15, 0
      %p56 = por %p54, %p55
      %p57 = scmp.ne.s32.totalorder %s49, %s51
      %p58 = scmp.eq.s32.totalorder %s20, 1
      %p59 = por %p57, %p58
      %p60 = scmp.ne.s32.totalorder %s51, %s52
      %p61 = scmp.eq.s32.totalorder %s20, 0
      %p62 = por %p60, %p61
      %p63 = scmp.ne.s32.totalorder %s51, %s52
      %p64 = scmp.eq.s32.totalorder %s21, 1
      %p65 = por %p63, %p64
      %p67 = scmp.ne.s32.totalorder %s52, %s66
      %p68 = scmp.eq.s32.totalorder %s21, 0
      %p69 = por %p67, %p68
      %s71 = sadd.s32 %s70, 1
      %p74 = scmp.eq.s32.totalorder %s15, 1
      %p75 = scmp.ne.s32.totalorder %s70, %s72
      %p76 = scmp.eq.s32.totalorder %s15, 0
      %p77 = por %p75, %p76
      %p78 = scmp.ne.s32.totalorder %s70, %s72
      %p79 = scmp.eq.s32.totalorder %s20, 1
      %p80 = por %p78, %p79
      %p81 = scmp.ne.s32.totalorder %s72, %s73
      %p82 = scmp.eq.s32.totalorder %s20, 0
      %p83 = por %p81, %p82
      %p84 = scmp.ne.s32.totalorder %s72, %s73
      %p85 = scmp.eq.s32.totalorder %s21, 1
      %p86 = por %p84, %p85
      %p88 = scmp.ne.s32.totalorder %s73, %s87
      %p89 = scmp.eq.s32.totalorder %s21, 0
      %p90 = por %p88, %p89
      %s91 = ssub.s32 %s15, %s22
      %p92 = scmp.eq.s32.totalorder %s91, 0
      %s94 = sadd.s32 %s93, 1
      %s95 = scalar_select %p92, %s93, %s94
      %p98 = pneg %p92
      %p99 = scmp.eq.s32.totalorder %s15, 1
      %p100 = por %p98, %p99
      %p101 = scmp.ne.s32.totalorder %s93, %s96
      %p102 = scmp.eq.s32.totalorder %s15, 0
      %p103 = por %p101, %p102
      %p104 = scmp.ne.s32.totalorder %s93, %s96
      %p105 = scmp.eq.s32.totalorder %s20, 1
      %p106 = por %p104, %p105
      %p107 = scmp.ne.s32.totalorder %s96, %s97
      %p108 = scmp.eq.s32.totalorder %s20, 0
      %p109 = por %p107, %p108
      %p110 = scmp.ne.s32.totalorder %s96, %s97
      %p111 = scmp.eq.s32.totalorder %s21, 1
      %p112 = por %p110, %p111
      %p114 = scmp.ne.s32.totalorder %s97, %s113
      %p115 = scmp.eq.s32.totalorder %s21, 0
      %p116 = por %p114, %p115
      %p117 = scmp.le.s32.totalorder 1, %s15
      %p118 = scmp.lt.s32.totalorder %s15, 3
      %p119 = pnand %p117, %p118
      %p120 = pneg %p119
      // Predicated region
      $region9: #{tpu_custom_call.1} parent=5 // pred_check
        _
      $region10: #{tpu_custom_call.1} parent=5 // pred_check_branch
        %122 = sbr.rel (%p119) target = $region12
      $region11: #{tpu_custom_call.1} parent=5 // pred_region
        %s123 = ssub.s32 %s15, 1
        // Predicated region
        $region13: #{tpu_custom_call.1} parent=11 // pred_check
          %p124 = pneg %p62
        $region14: #{tpu_custom_call.1} parent=11 // pred_check_branch
          %126 = sbr.rel (%p124) target = $region16
        $region15: #{tpu_custom_call.1} parent=11 // pred_region
          _
        $region16: #{tpu_custom_call.1} parent=11 // pred_fallthru
          _
        // Predicated region
        $region17: #{tpu_custom_call.1} parent=11 // pred_check
          %p127 = pneg %p83
        $region18: #{tpu_custom_call.1} parent=11 // pred_check_branch
          %129 = sbr.rel (%p127) target = $region20
        $region19: #{tpu_custom_call.1} parent=11 // pred_region
          _
        $region20: #{tpu_custom_call.1} parent=11 // pred_fallthru
          _
      $region12: #{tpu_custom_call.1} parent=5 // pred_fallthru
        _
      %p130 = scmp.lt.s32.totalorder %s15, 2
      // Predicated region
      $region21: #{tpu_custom_call.1} parent=5 // pred_check
        %p131 = pneg %p130
      $region22: #{tpu_custom_call.1} parent=5 // pred_check_branch
        %133 = sbr.rel (%p131) target = $region24
      $region23: #{tpu_custom_call.1} parent=5 // pred_region
        // Predicated region
        $region25: #{tpu_custom_call.1} parent=23 // pred_check
          %p134 = pneg %p35
        $region26: #{tpu_custom_call.1} parent=23 // pred_check_branch
          %136 = sbr.rel (%p134) target = $region28
        $region27: #{tpu_custom_call.1} parent=23 // pred_region
          %s137 = sand.u32 %s25, 1
          %s138 = scalar_lea.sflag [#allocation3], %s137
          %s139 = sand.u32 %s25, 1
          %s140 = smul.addr %s139, 64
          %s141 = scalar_lea.vmem [#allocation2], %s140
          %s143 = ssub.s32 1024, 1024
          %144 = vsyncadd %s138, %s143
          %s145 = smul.addr %s15, 8
          %s146 = smul.addr %s145, 128
          %s147 = scalar_lea.hbm %s0, %s146
          %s148 = sshll.u32 %s141, 4
          %s149 = int_to_ptr.vmem [resolvable:$true] %s148
          %154 = dma.hbm_to_vmem [thread:$0]  %s147, 1024, %s149, %s138, 256, 256, 16
        $region28: #{tpu_custom_call.1} parent=23 // pred_fallthru
          _
      $region24: #{tpu_custom_call.1} parent=5 // pred_fallthru
        _
      %p155 = scmp.le.s32.totalorder 1, %s15
      %p156 = scmp.lt.s32.totalorder %s15, 3
      %p157 = pnand %p155, %p156
      %p158 = pneg %p157
      // Predicated region
      $region29: #{tpu_custom_call.1} parent=5 // pred_check
        _
      $region30: #{tpu_custom_call.1} parent=5 // pred_check_branch
        %160 = sbr.rel (%p157) target = $region32
      $region31: #{tpu_custom_call.1} parent=5 // pred_region
        %s161 = ssub.s32 %s15, 1
        %s162 = sand.u32 %s28, 1
        %s163 = scalar_lea.sflag [#allocation3], %s162
        %s164 = sand.u32 %s28, 1
        %s165 = smul.addr %s164, 64
        %s166 = scalar_lea.vmem [#allocation2], %s165
        // Predicated region
        $region33: #{tpu_custom_call.1} parent=31 // pred_check
          %p167 = pneg %p41
        $region34: #{tpu_custom_call.1} parent=31 // pred_check_branch
          %169 = sbr.rel (%p167) target = $region36
        $region35: #{tpu_custom_call.1} parent=31 // pred_region
          %170 = dma.done %s163, 1024
        $region36: #{tpu_custom_call.1} parent=31 // pred_fallthru
          _
        %s171 = sand.u32 %s28, 1
        %s172 = scalar_lea.sflag [#allocation3], %s171
        %s173 = sand.u32 %s28, 1
        %s174 = smul.addr %s173, 64
        %s175 = scalar_lea.vmem [#allocation2], %s174
        %p176 = pneg %p41
        %p177 = pneg %p38
        %p178 = pneg %p62
        %p179 = pneg %p59
        %p180 = pneg %p83
        %p181 = pneg %p80
        %p182 = pneg %p109
        %p183 = pneg %p106
        %s184 = sand.u32 %s96, 1
        %s185 = scalar_lea.sflag [#allocation4], %s184
        %s186 = sand.u32 %s96, 1
        %s187 = smul.addr %s186, 64
        %s188 = scalar_lea.vmem [#allocation5], %s187
        %v189 = vld [vmem:[%s166] sm:$0xff]
        %v190 = vld [vmem:[%s166 + $0x8] sm:$0xff]
        %v191 = vld [vmem:[%s166 + $0x10] sm:$0xff]
        %v192 = vld [vmem:[%s166 + $0x18] sm:$0xff]
        %v193 = vld [vmem:[%s166 + $0x20] sm:$0xff]
        %v194 = vld [vmem:[%s166 + $0x28] sm:$0xff]
        %v195 = vld [vmem:[%s166 + $0x30] sm:$0xff]
        %v196 = vld [vmem:[%s166 + $0x38] sm:$0xff]
        %vm197 = vcmask 556032
        %v198 = vsel %vm197, %v190, 0.0
        %v199 = vadd.f32 %v189, %v198
        %200 = vadd.xlane.f32.xlu0 %v199
        %v201 = vpop.xlane.xlu0 %200
        %v202 = vsel %vm197, %v192, 0.0
        %v203 = vadd.f32 %v191, %v202
        %204 = vadd.xlane.f32.xlu0 %v203
        %v205 = vpop.xlane.xlu0 %204
        %v206 = vsel %vm197, %v194, 0.0
        %v207 = vadd.f32 %v193, %v206
        %208 = vadd.xlane.f32.xlu0 %v207
        %v209 = vpop.xlane.xlu0 %208
        %v210 = vsel %vm197, %v196, 0.0
        %v211 = vadd.f32 %v195, %v210
        %212 = vadd.xlane.f32.xlu0 %v211
        %v213 = vpop.xlane.xlu0 %212
        %v214 = vmul.f32 %v201, 0.0051020407
        %v215 = vmul.f32 %v205, 0.0051020407
        %v216 = vmul.f32 %v209, 0.0051020407
        %v217 = vmul.f32 %v213, 0.0051020407
        %v218 = vld [vmem:[%s1] sm:$0xff]
        %v219 = vld [vmem:[%s1 + $0x8] sm:$0xff]
        %v220 = vld [vmem:[%s1 + $0x10] sm:$0xff]
        %v221 = vld [vmem:[%s1 + $0x18] sm:$0xff]
        %v226 = vlaneseq
        %v227 = vand.u32 %v226, 127
        %v228 = vlaneseq
        %v229 = vshrl.u32 %v228, 7
        %v230 = vsub.s32 %v227, %v229
        %v231 = vrot.slane %v214, %v230
        %v232 = vadd.s32 %v227, 4294967288
        %v233 = vlaneseq
        %v234 = vshrl.u32 %v233, 7
        %v235 = vsub.s32 %v232, %v234
        %v236 = vrot.slane %v215, %v235
        %vm237 = vcmask 130112
        %v238 = vsel %vm237, %v236, %v231
        %v239 = vadd.s32 %v227, 4294967280
        %v240 = vlaneseq
        %v241 = vshrl.u32 %v240, 7
        %v242 = vsub.s32 %v239, %v241
        %v243 = vrot.slane %v216, %v242
        %vm244 = vcmask 195712
        %v245 = vsel %vm244, %v243, %v238
        %v246 = vadd.s32 %v227, 4294967272
        %v247 = vlaneseq
        %v248 = vshrl.u32 %v247, 7
        %v249 = vsub.s32 %v246, %v248
        %v250 = vrot.slane %v217, %v249
        %vm251 = vcmask 261312
        %v252 = vsel %vm251, %v250, %v245
        %vm253 = vcmask 261120
        %v254 = vsel %vm253, %v252, 0
        %256 = vmatprep.subr.mxu0 0.0
        %257 = vmatpush1.msra.mxu0 0.0
        %258 = vmatprep.subr.mxu0 0.0
        %259 = vmatpush1.msra.mxu0 0.0
        %260 = vmatprep.subr.mxu0 0.0
        %261 = vmatpush1.msra.mxu0 0.0
        %262 = vmatprep.subr.mxu0 0.0
        %263 = vmatpush1.msra.mxu0 0.0
        %264 = vmatprep.subr.mxu0 0.0
        %265 = vmatpush1.msra.mxu0 0.0
        %266 = vmatprep.subr.mxu0 0.0
        %267 = vmatpush1.msra.mxu0 0.0
        %268 = vmatprep.subr.mxu0 0.0
        %269 = vmatpush1.msra.mxu0 0.0
        %270 = vmatprep.subr.mxu0 0.0
        %271 = vmatpush1.msra.mxu0 0.0
        %272 = vmatprep.subr.mxu0 0.0
        %273 = vmatpush1.msra.mxu0 0.0
        %274 = vmatprep.subr.mxu0 0.0
        %275 = vmatpush1.msra.mxu0 0.0
        %276 = vmatprep.subr.mxu0 0.0
        %277 = vmatpush1.msra.mxu0 0.0
        %278 = vmatprep.subr.mxu0 0.0
        %279 = vmatpush1.msra.mxu0 0.0
        %280 = vmatprep.subr.mxu0 0.0
        %281 = vmatpush1.msra.mxu0 %v221
        %282 = vmatprep.subr.mxu0 0.0
        %283 = vmatpush1.msra.mxu0 %v220
        %284 = vmatprep.subr.mxu0 0.0
        %285 = vmatpush1.msra.mxu0 %v219
        %286 = vmatprep.subr.mxu0 0.0
        %287 = vmatpush1.msra.mxu0 %v218
        %288 = vmatprep.subr.mxu0 0.0
        %289 = vmatpush2.msra.mxu0 0.0
        %290 = vmatprep.subr.mxu0 0.0
        %291 = vmatpush2.msra.mxu0 0.0
        %292 = vmatprep.subr.mxu0 0.0
        %293 = vmatpush2.msra.mxu0 0.0
        %294 = vmatprep.subr.mxu0 0.0
        %295 = vmatpush2.msra.mxu0 0.0
        %296 = vmatprep.subr.mxu0 0.0
        %297 = vmatpush2.msra.mxu0 0.0
        %298 = vmatprep.subr.mxu0 0.0
        %299 = vmatpush2.msra.mxu0 0.0
        %300 = vmatprep.subr.mxu0 0.0
        %301 = vmatpush2.msra.mxu0 0.0
        %302 = vmatprep.subr.mxu0 0.0
        %303 = vmatpush2.msra.mxu0 0.0
        %304 = vmatprep.subr.mxu0 0.0
        %305 = vmatpush2.msra.mxu0 0.0
        %306 = vmatprep.subr.mxu0 0.0
        %307 = vmatpush2.msra.mxu0 0.0
        %308 = vmatprep.subr.mxu0 0.0
        %309 = vmatpush2.msra.mxu0 0.0
        %310 = vmatprep.subr.mxu0 0.0
        %311 = vmatpush2.msra.mxu0 0.0
        %312 = vmatprep.subr.mxu0 0.0
        %313 = vmatpush2.msra.mxu0 0.0
        %314 = vmatprep.subr.mxu0 0.0
        %315 = vmatpush2.msra.mxu0 0.0
        %316 = vmatprep.subr.mxu0 0.0
        %317 = vmatpush2.msra.mxu0 0.0
        %318 = vmatprep.subr.mxu0 0.0
        %319 = vmatpush2.msra.mxu0 0.0
        %320 = vmatprep.mubr.f32.mxu0 0.0
        %321 = vmatmul.mubr.f32.gmra.mxu0 %v254
        %v322 = vpop.f32.mrf.mxu0
        %v323 = vadd.f32 0.0, %v322
        %v324 = vpop.f32.mrf.mxu0
        %325 = vdwg.mxu0
        %v326 = vmax.f32 %v323, 0.0
        %v327 = vld [vmem:[%s2] sm:$0x3]
        %vm328 = vcmask 15360
        %v330 = vsel %vm328, %v326, 0
        %vm332 = vcmask 1041408
        %v334 = vsel %vm332, %v327, 0
        %336 = vmatprep.subr.mxu0 0.0
        %337 = vmatpush1.msra.mxu0 0.0
        %338 = vmatprep.subr.mxu0 0.0
        %339 = vmatpush1.msra.mxu0 0.0
        %340 = vmatprep.subr.mxu0 0.0
        %341 = vmatpush1.msra.mxu0 0.0
        %342 = vmatprep.subr.mxu0 0.0
        %343 = vmatpush1.msra.mxu0 0.0
        %344 = vmatprep.subr.mxu0 0.0
        %345 = vmatpush1.msra.mxu0 0.0
        %346 = vmatprep.subr.mxu0 0.0
        %347 = vmatpush1.msra.mxu0 0.0
        %348 = vmatprep.subr.mxu0 0.0
        %349 = vmatpush1.msra.mxu0 0.0
        %350 = vmatprep.subr.mxu0 0.0
        %351 = vmatpush1.msra.mxu0 0.0
        %352 = vmatprep.subr.mxu0 0.0
        %353 = vmatpush1.msra.mxu0 0.0
        %354 = vmatprep.subr.mxu0 0.0
        %355 = vmatpush1.msra.mxu0 0.0
        %356 = vmatprep.subr.mxu0 0.0
        %357 = vmatpush1.msra.mxu0 0.0
        %358 = vmatprep.subr.mxu0 0.0
        %359 = vmatpush1.msra.mxu0 0.0
        %360 = vmatprep.subr.mxu0 0.0
        %361 = vmatpush1.msra.mxu0 0.0
        %362 = vmatprep.subr.mxu0 0.0
        %363 = vmatpush1.msra.mxu0 0.0
        %364 = vmatprep.subr.mxu0 0.0
        %365 = vmatpush1.msra.mxu0 0.0
        %366 = vmatprep.subr.mxu0 0.0
        %367 = vmatpush1.msra.mxu0 %v334
        %368 = vmatprep.subr.mxu0 0.0
        %369 = vmatpush2.msra.mxu0 0.0
        %370 = vmatprep.subr.mxu0 0.0
        %371 = vmatpush2.msra.mxu0 0.0
        %372 = vmatprep.subr.mxu0 0.0
        %373 = vmatpush2.msra.mxu0 0.0
        %374 = vmatprep.subr.mxu0 0.0
        %375 = vmatpush2.msra.mxu0 0.0
        %376 = vmatprep.subr.mxu0 0.0
        %377 = vmatpush2.msra.mxu0 0.0
        %378 = vmatprep.subr.mxu0 0.0
        %379 = vmatpush2.msra.mxu0 0.0
        %380 = vmatprep.subr.mxu0 0.0
        %381 = vmatpush2.msra.mxu0 0.0
        %382 = vmatprep.subr.mxu0 0.0
        %383 = vmatpush2.msra.mxu0 0.0
        %384 = vmatprep.subr.mxu0 0.0
        %385 = vmatpush2.msra.mxu0 0.0
        %386 = vmatprep.subr.mxu0 0.0
        %387 = vmatpush2.msra.mxu0 0.0
        %388 = vmatprep.subr.mxu0 0.0
        %389 = vmatpush2.msra.mxu0 0.0
        %390 = vmatprep.subr.mxu0 0.0
        %391 = vmatpush2.msra.mxu0 0.0
        %392 = vmatprep.subr.mxu0 0.0
        %393 = vmatpush2.msra.mxu0 0.0
        %394 = vmatprep.subr.mxu0 0.0
        %395 = vmatpush2.msra.mxu0 0.0
        %396 = vmatprep.subr.mxu0 0.0
        %397 = vmatpush2.msra.mxu0 0.0
        %398 = vmatprep.subr.mxu0 0.0
        %399 = vmatpush2.msra.mxu0 0.0
        %400 = vmatprep.mubr.f32.mxu0 0.0
        %401 = vmatmul.mubr.f32.gmra.mxu0 %v330
        %v402 = vpop.f32.mrf.mxu0
        %v403 = vadd.f32 0.0, %v402
        %v404 = vpop.f32.mrf.mxu0
        %405 = vdwg.mxu0
        %v406 = vxor.u32 %v403, 2147483648
        %v407 = vmul.f32 %v406, 1.442695
        %v408 = vpow.pop %v407
        %v409 = vadd.f32 %v408, 1.0
        %v410 = vrcp.pop %v409
        %v411 = vmul.f32 1.0, %v410
        %v412 = vlaneseq
        %v413 = vshrl.u32 %v412, 7
        %v414 = vsub.s32 0, %v413
        %v415 = vrot.slane %v411, %v414
        %417 = vbcast.lane.b32.xlu0 %v415, 256
        %v418 = vpop.permute.xlu0 %417
        %s420 = sor.u32 256, 8
        %421 = vbcast.lane.b32.xlu0 %v415, %s420
        %v422 = vpop.permute.xlu0 %421
        %s424 = sor.u32 256, 16
        %425 = vbcast.lane.b32.xlu0 %v415, %s424
        %v426 = vpop.permute.xlu0 %425
        %s428 = sor.u32 256, 24
        %429 = vbcast.lane.b32.xlu0 %v415, %s428
        %v430 = vpop.permute.xlu0 %429
        %v431 = vmul.f32 %v189, %v418
        %v432 = vmul.f32 %v190, %v418
        %v433 = vmul.f32 %v191, %v422
        %v434 = vmul.f32 %v192, %v422
        %v435 = vmul.f32 %v193, %v426
        %v436 = vmul.f32 %v194, %v426
        %v437 = vmul.f32 %v195, %v430
        %v438 = vmul.f32 %v196, %v430
        %439 = vst [vmem:[%s188] sm:$0xff] %v431
        %440 = vst.msk [vmem:[%s188 + $0x8] sm:$0xff] %vm197, %v432
        %441 = vst [vmem:[%s188 + $0x10] sm:$0xff] %v433
        %442 = vst.msk [vmem:[%s188 + $0x18] sm:$0xff] %vm197, %v434
        %443 = vst [vmem:[%s188 + $0x20] sm:$0xff] %v435
        %444 = vst.msk [vmem:[%s188 + $0x28] sm:$0xff] %vm197, %v436
        %445 = vst [vmem:[%s188 + $0x30] sm:$0xff] %v437
        %446 = vst.msk [vmem:[%s188 + $0x38] sm:$0xff] %vm197, %v438
        %s447 = sand.u32 %s96, 1
        %s448 = scalar_lea.sflag [#allocation4], %s447
        %s449 = sand.u32 %s96, 1
        %s450 = smul.addr %s449, 64
        %s451 = scalar_lea.vmem [#allocation5], %s450
        // Predicated region
        $region37: #{tpu_custom_call.1} parent=31 // pred_check
          %p452 = pneg %p106
        $region38: #{tpu_custom_call.1} parent=31 // pred_check_branch
          %454 = sbr.rel (%p452) target = $region40
        $region39: #{tpu_custom_call.1} parent=31 // pred_region
          %s456 = ssub.s32 1024, 1024
          %457 = vsyncadd %s448, %s456
          %s458 = smul.addr %s20, 8
          %s459 = smul.addr %s458, 128
          %s460 = scalar_lea.hbm %s3, %s459
          %s461 = sshll.u32 %s451, 4
          %s462 = int_to_ptr.vmem [resolvable:$true] %s461
          %467 = dma.vmem_to_hbm [thread:$0]  %s462, 1024, %s460, %s448, 256, 256, 16
        $region40: #{tpu_custom_call.1} parent=31 // pred_fallthru
          _
      $region32: #{tpu_custom_call.1} parent=5 // pred_fallthru
        _
      %p468 = scmp.le.s32.totalorder 2, %s15
      // Predicated region
      $region41: #{tpu_custom_call.1} parent=5 // pred_check
        %p469 = pneg %p468
      $region42: #{tpu_custom_call.1} parent=5 // pred_check_branch
        %471 = sbr.rel (%p469) target = $region44
      $region43: #{tpu_custom_call.1} parent=5 // pred_region
        %s472 = ssub.s32 %s15, 2
        // Predicated region
        $region45: #{tpu_custom_call.1} parent=43 // pred_check
          %p473 = pneg %p112
        $region46: #{tpu_custom_call.1} parent=43 // pred_check_branch
          %475 = sbr.rel (%p473) target = $region48
        $region47: #{tpu_custom_call.1} parent=43 // pred_region
          %s476 = sand.u32 %s97, 1
          %s477 = scalar_lea.sflag [#allocation4], %s476
          %s478 = sand.u32 %s97, 1
          %s479 = smul.addr %s478, 64
          %s480 = scalar_lea.vmem [#allocation5], %s479
          %481 = dma.done %s477, 1024
        $region48: #{tpu_custom_call.1} parent=43 // pred_fallthru
          _
      $region44: #{tpu_custom_call.1} parent=5 // pred_fallthru
        _
    $region6: #{tpu_custom_call.1} parent=1 // loop_footer
      %s19 = sadd.s32 1, %s15
    $region7: #{tpu_custom_call.1} parent=1 // loop_footer_branch
      %14 = sbr.rel target = $region3
    $region8: #{tpu_custom_call.1} parent=1 // loop_exit
      _
    %482 = vsyncpa [#allocation3], 1
    %s483 = scalar_lea.sflag [#allocation3], 1
    %484 = vsyncpa %s483, 1
    %485 = vsyncpa [#allocation4], 1
    %s486 = scalar_lea.sflag [#allocation4], 1
    %487 = vsyncpa %s486, 1

</llo_original>
